<compile_context>
chip_gen: v5e
topology: v5e:2x2
jax: 0.10.0
libtpu: 0.0.40
codegen_flags: <defaults>
</compile_context>

<pallas_src>
import functools

import jax
import jax.numpy as jnp
import numpy as np
from jax.experimental import pallas as pl
from jax.experimental.pallas import tpu as pltpu


# ---------------------------------------------------------------------------
# Pallas kernel: single batched conv-as-matmul + per-sample LayerNorm + LeakyReLU
# ---------------------------------------------------------------------------
def _disc_block_kernel(pt_ref, w_ref, gb_ref, o_ref, *, n_batch: int, p_pad: int,
                       m_valid: int, eps: float, neg_slope: float):
    # pt_ref: (K+1, N*Pp) bf16  im2col patches for ALL samples, last row = valid-lane mask
    # w_ref:  (Cout, K+1) bf16  conv weight with bias folded into the last column
    # gb_ref: (Cout, 2)   f32   columns = [gamma, beta]
    # o_ref:  (N, Cout, Pp) f32
    pt = pt_ref[...]
    w = w_ref[...]
    gamma = gb_ref[:, 0:1]                          # (Cout, 1)
    beta = gb_ref[:, 1:2]                           # (Cout, 1)

    # One MXU matmul for the whole batch; bf16 inputs, f32 accumulation.  The folded
    # bias row is zero on padded lanes, so padded lanes of y are exactly 0.
    y = jnp.dot(w, pt, preferred_element_type=jnp.float32)      # (Cout, N*Pp)

    m = jnp.float32(m_valid)                        # Cout * P_valid (pads excluded)
    for n in range(n_batch):                        # static unroll; N is tiny
        # Lane-aligned (Pp is a multiple of 128) per-sample slice -> no relayout copy.
        yn = y[:, n * p_pad:(n + 1) * p_pad]        # (Cout, Pp)

        # One-pass statistics: both reductions go back-to-back on the XLU.
        s = jnp.sum(yn)
        ss = jnp.sum(yn * yn)
        mean = s / m
        var = (ss - s * s / m) / (m - 1.0)          # unbiased (M-1), like torch.std
        std = jnp.sqrt(var)

        # Fold normalization + per-channel affine into one (Cout,1) scale/shift so the
        # (Cout, Pp) epilogue is one FMA + one select.
        scale = gamma / (std + eps)                 # (Cout, 1)
        shift = beta - mean * scale                 # (Cout, 1)
        z = yn * scale + shift                      # (Cout, Pp)

        # LeakyReLU (negative_slope = 0.01); lane-dense, unmasked store.
        o_ref[n] = jnp.where(z >= 0, z, neg_slope * z)


# ---------------------------------------------------------------------------
# Glue: transposed im2col (bf16), pad + fold batch into lanes, pallas_call
# ---------------------------------------------------------------------------
def _im2col3d_T(x, kD, kH, kW, sD, sH, sW):
    """x: (N, C, D, H, W) -> patches_T (N, C*kD*kH*kW, Do*Ho*Wo).

    K ordering (c major, kernel offsets minor) matches PyTorch's weight.reshape(Cout, -1).
    """
    N, C, D, H, W = x.shape
    Do = (D - kD) // sD + 1
    Ho = (H - kH) // sH + 1
    Wo = (W - kW) // sW + 1
    cols = []
    for kd in range(kD):
        for kh in range(kH):
            for kw in range(kW):
                cols.append(x[:, :,
                              kd:kd + sD * Do:sD,
                              kh:kh + sH * Ho:sH,
                              kw:kw + sW * Wo:sW])              # (N, C, Do, Ho, Wo)
    cols = jnp.stack(cols, axis=2)                              # (N, C, k^3, Do, Ho, Wo)
    return cols.reshape(N, C * kD * kH * kW, Do * Ho * Wo), (Do, Ho, Wo)


def discriminator_block(x, weight, bias, gamma, beta, *, stride, eps=1e-5,
                        neg_slope=0.01):
    """x: (N, Cin, D, H, W), weight: (Cout, Cin, kD, kH, kW). Returns NCDHW f32 output."""
    N, Cin, D, H, W = x.shape
    Cout, _, kD, kH, kW = weight.shape
    s = stride

    # bf16 BEFORE im2col: the k^3 x expansion / stack / reshape move half the bytes.
    # TODO(synk): at realistic shapes, fuse the im2col into the kernel instead
    # (x via BlockSpec(memory_space=pl.ANY) + per-(kd,kh,kw) DMA, or a sum of k^3
    # small (Cout,Cin)@(Cin,P) matmuls over shifted VMEM views) to avoid the 27x
    # HBM read blow-up of materialized patches.
    xb = x.astype(jnp.bfloat16)
    patches_T, (Do, Ho, Wo) = _im2col3d_T(xb, kD, kH, kW, s, s, s)   # (N, K, P) bf16
    K = Cin * kD * kH * kW
    P = Do * Ho * Wo

    # Pad P to the next multiple of 128 so per-sample lane slices are tile aligned and
    # all output stores are unmasked.  Pad lanes are zero -> stats stay exact (m = Cout*P).
    Pp = ((P + 127) // 128) * 128
    patches_T = jnp.pad(patches_T, ((0, 0), (0, 0), (0, Pp - P)))

    # Fold N onto lanes: (K, N*Pp).  Append a "ones on valid lanes / zeros on pads" row
    # so the conv bias rides the matmul and padded lanes of y stay exactly 0.
    pt2d = jnp.transpose(patches_T, (1, 0, 2)).reshape(K, N * Pp)
    valid = ((jnp.arange(N * Pp) % Pp) < P).astype(jnp.bfloat16).reshape(1, N * Pp)
    pt_aug = jnp.concatenate([pt2d, valid], axis=0)                  # (K+1, N*Pp)

    w_aug = jnp.concatenate(
        [weight.reshape(Cout, K), bias.reshape(Cout, 1)], axis=1).astype(jnp.bfloat16)
    gb = jnp.stack([gamma, beta], axis=1).astype(jnp.float32)        # (Cout, 2)

    kernel = functools.partial(_disc_block_kernel, n_batch=N, p_pad=Pp,
                               m_valid=Cout * P, eps=eps, neg_slope=neg_slope)

    ce = pl.CostEstimate(
        flops=2 * Cout * (K + 1) * N * Pp + 8 * N * Cout * Pp,
        transcendentals=N,                                           # one sqrt per sample
        bytes_accessed=(pt_aug.size * 2 + w_aug.size * 2 + gb.size * 4
                        + N * Cout * Pp * 4))

    # Single grid step: per-sample work (~0.4 MFLOP, ~50 KB) is far below the ~0.35us
    # per-step overhead, so one fused step beats a grid over N even on v7x's 2 TCs.
    # VMEM footprint is ~150 KB -> no vmem_limit needed at these shapes.
    # TODO(synk): for large P, add a P grid axis with two-pass sum/sumsq stats and size
    # the P tile per generation (v7x 64 MiB phys / 32 MiB scoped, v5e 16 MiB scoped
    # default), setting vmem_limit_bytes explicitly.
    out = pl.pallas_call(
        kernel,
        out_shape=jax.ShapeDtypeStruct((N, Cout, Pp), jnp.float32),
        grid=(1,),
        in_specs=[
            pl.BlockSpec((K + 1, N * Pp), lambda i: (0, 0)),
            pl.BlockSpec((Cout, K + 1), lambda i: (0, 0)),
            pl.BlockSpec((Cout, 2), lambda i: (0, 0)),
        ],
        out_specs=pl.BlockSpec((N, Cout, Pp), lambda i: (0, 0, 0)),
        cost_estimate=ce,
        compiler_params=pltpu.CompilerParams(
            dimension_semantics=("arbitrary",)),
    )(pt_aug, w_aug, gb)

    # Drop pad lanes; (N, Cout, P) is already channels-first so the reshape is free.
    # (Could emit bf16 here to halve writeback if downstream tolerates it.)
    return out[:, :, :P].reshape(N, Cout, Do, Ho, Wo)


# ---------------------------------------------------------------------------
# Pure-JAX reference (f32 end to end) for a sanity check
# ---------------------------------------------------------------------------
def _reference(x, weight, bias, gamma, beta, *, stride, eps=1e-5, neg_slope=0.01):
    y = jax.lax.conv_general_dilated(
        x, weight, window_strides=(stride,) * 3, padding="VALID",
        dimension_numbers=("NCDHW", "OIDHW", "NCDHW"))
    y = y + bias.reshape(1, -1, 1, 1, 1)
    N = y.shape[0]
    flat = y.reshape(N, -1)
    mean = flat.mean(axis=1).reshape(N, 1, 1, 1, 1)
    std = jnp.std(flat, axis=1, ddof=1).reshape(N, 1, 1, 1, 1)
    yn = (y - mean) / (std + eps)
    yn = gamma.reshape(1, -1, 1, 1, 1) * yn + beta.reshape(1, -1, 1, 1, 1)
    return jnp.where(yn >= 0, yn, neg_slope * yn)


# ---------------------------------------------------------------------------
if __name__ == "__main__":
    # Module hyper-parameters (small, consistent with the PyTorch module).
    batch, in_dim, out_dim = 2, 4, 8
    kernel_size, stride = 3, 1
    D = H = W = 8   # -> output spatial 6x6x6, P = 216 (padded to 256 in the wrapper)

    key = jax.random.PRNGKey(0)
    kx, kw, kb, kg = jax.random.split(key, 4)

    x = jax.random.normal(kx, (batch, in_dim, D, H, W), dtype=jnp.float32)

    # Deterministic parameter init (shapes from torch.nn.Conv3d / LayerNorm).
    fan_in = in_dim * kernel_size ** 3
    weight = jax.random.normal(
        kw, (out_dim, in_dim, kernel_size, kernel_size, kernel_size),
        dtype=jnp.float32) / jnp.sqrt(jnp.float32(fan_in))
    bias = jax.random.normal(kb, (out_dim,), dtype=jnp.float32) * 0.1
    gamma = jax.random.uniform(kg, (out_dim,), dtype=jnp.float32)   # ~Tensor.uniform_()
    beta = jnp.zeros((out_dim,), dtype=jnp.float32)

    out = discriminator_block(x, weight, bias, gamma, beta, stride=stride)
    out = jax.block_until_ready(out)

    ref = jax.block_until_ready(
        _reference(x, weight, bias, gamma, beta, stride=stride))

    assert out.shape == (batch, out_dim, 6, 6, 6), out.shape
    # bf16 MXU inputs (patches, weights, folded bias) with f32 accumulation -> relaxed
    # tolerance vs the f32 reference; stats are computed from the bf16-rounded conv.
    np.testing.assert_allclose(np.asarray(out), np.asarray(ref),
                               rtol=3e-2, atol=3e-2)
    print("KERNEL_OK")
</pallas_src>

<mosaic_0001>
module attributes {stable_mosaic.version = 11 : i64} {
  func.func @_disc_block_kernel(%arg0: i32, %arg1: memref<109x512xbf16, #tpu.memory_space<vmem>>, %arg2: memref<8x109xbf16, #tpu.memory_space<vmem>>, %arg3: memref<8x2xf32, #tpu.memory_space<vmem>>, %arg4: memref<2x8x256xf32, #tpu.memory_space<vmem>>) attributes {dimension_semantics = [#tpu.dimension_semantics<arbitrary>], iteration_bounds = array<i64: 1>, scalar_prefetch = 0 : i64, scratch_operands = 0 : i64, tpu.core_type = #tpu.core_type<tc>, window_params = [{pipeline_mode = #tpu.pipeline_mode<synchronous>, transform_indices = @transform_0, window_bounds = array<i64: 109, 512>}, {pipeline_mode = #tpu.pipeline_mode<synchronous>, transform_indices = @transform_1, window_bounds = array<i64: 8, 109>}, {pipeline_mode = #tpu.pipeline_mode<synchronous>, transform_indices = @transform_2, window_bounds = array<i64: 8, 2>}, {pipeline_mode = #tpu.pipeline_mode<synchronous>, transform_indices = @transform_3, window_bounds = array<i64: 2, 8, 256>}]} {
    %c0 = arith.constant 0 : index
    %c0_0 = arith.constant 0 : index
    %0 = vector.load %arg1[%c0, %c0_0] : memref<109x512xbf16, #tpu.memory_space<vmem>>, vector<109x512xbf16>
    %c0_1 = arith.constant 0 : index
    %c0_2 = arith.constant 0 : index
    %1 = vector.load %arg2[%c0_1, %c0_2] : memref<8x109xbf16, #tpu.memory_space<vmem>>, vector<8x109xbf16>
    %c0_3 = arith.constant 0 : index
    %c0_4 = arith.constant 0 : index
    %2 = vector.load %arg3[%c0_3, %c0_4] : memref<8x2xf32, #tpu.memory_space<vmem>>, vector<8x1xf32>
    %c0_5 = arith.constant 0 : index
    %c1 = arith.constant 1 : index
    %3 = vector.load %arg3[%c0_5, %c1] : memref<8x2xf32, #tpu.memory_space<vmem>>, vector<8x1xf32>
    %cst = arith.constant dense<0.000000e+00> : vector<8x512xf32>
    %4 = tpu.matmul %1, %0, %cst {dimension_numbers = #tpu.dot_dimension_numbers<[1], [0], [0], [1], [0, 0, 1, 1], [], []>} : vector<8x109xbf16>, vector<109x512xbf16>, vector<8x512xf32> -> vector<8x512xf32>
    %5 = vector.extract_strided_slice %4 {offsets = [0, 0], sizes = [8, 256], strides = [1, 1]} : vector<8x512xf32> to vector<8x256xf32>
    %6 = vector.shape_cast %5 : vector<8x256xf32> to vector<1x8x256xf32>
    %cst_6 = arith.constant dense<0.000000e+00> : vector<1xf32>
    %7 = vector.multi_reduction <add>, %6, %cst_6 [1, 2] : vector<1x8x256xf32> to vector<1xf32>
    %8 = vector.shape_cast %7 : vector<1xf32> to vector<1x1x1xf32>
    %9 = vector.extract %8[0, 0, 0] : f32 from vector<1x1x1xf32>
    %10 = arith.mulf %5, %5 : vector<8x256xf32>
    %11 = vector.shape_cast %10 : vector<8x256xf32> to vector<1x8x256xf32>
    %cst_7 = arith.constant dense<0.000000e+00> : vector<1xf32>
    %12 = vector.multi_reduction <add>, %11, %cst_7 [1, 2] : vector<1x8x256xf32> to vector<1xf32>
    %13 = vector.shape_cast %12 : vector<1xf32> to vector<1x1x1xf32>
    %14 = vector.extract %13[0, 0, 0] : f32 from vector<1x1x1xf32>
    %cst_8 = arith.constant 1.728000e+03 : f32
    %15 = arith.divf %9, %cst_8 : f32
    %16 = arith.mulf %9, %9 : f32
    %cst_9 = arith.constant 1.728000e+03 : f32
    %17 = arith.divf %16, %cst_9 : f32
    %18 = arith.subf %14, %17 : f32
    %cst_10 = arith.constant 1.728000e+03 : f32
    %cst_11 = arith.constant 1.000000e+00 : f32
    %19 = arith.subf %cst_10, %cst_11 : f32
    %20 = arith.divf %18, %19 : f32
    %21 = math.sqrt %20 : f32
    %cst_12 = arith.constant 9.99999974E-6 : f32
    %22 = arith.addf %21, %cst_12 : f32
    %23 = vector.broadcast %22 : f32 to vector<8x1xf32>
    %24 = arith.divf %2, %23 : vector<8x1xf32>
    %25 = vector.broadcast %15 : f32 to vector<8x1xf32>
    %26 = arith.mulf %25, %24 : vector<8x1xf32>
    %27 = arith.subf %3, %26 : vector<8x1xf32>
    %28 = vector.broadcast %24 : vector<8x1xf32> to vector<8x256xf32>
    %29 = arith.mulf %5, %28 : vector<8x256xf32>
    %30 = vector.broadcast %27 : vector<8x1xf32> to vector<8x256xf32>
    %31 = arith.addf %29, %30 : vector<8x256xf32>
    %cst_13 = arith.constant 0.000000e+00 : f32
    %32 = vector.broadcast %cst_13 : f32 to vector<8x256xf32>
    %33 = arith.cmpf oge, %31, %32 : vector<8x256xf32>
    %cst_14 = arith.constant 0.00999999977 : f32
    %34 = vector.broadcast %cst_14 : f32 to vector<8x256xf32>
    %35 = arith.mulf %34, %31 : vector<8x256xf32>
    %36 = arith.select %33, %31, %35 : vector<8x256xi1>, vector<8x256xf32>
    %c0_15 = arith.constant 0 : index
    %c0_16 = arith.constant 0 : index
    %c0_17 = arith.constant 0 : index
    %37 = vector.load %arg4[%c0_15, %c0_16, %c0_17] : memref<2x8x256xf32, #tpu.memory_space<vmem>>, vector<1x8x256xf32>
    %38 = vector.shape_cast %37 : vector<1x8x256xf32> to vector<8x256xf32>
    %39 = vector.shape_cast %36 : vector<8x256xf32> to vector<1x8x256xf32>
    tpu.vector_store %arg4[%c0_15, %c0_16, %c0_17], %39 {strides = array<i32>} : memref<2x8x256xf32, #tpu.memory_space<vmem>>, vector<1x8x256xf32>,
    %40 = vector.extract_strided_slice %4 {offsets = [0, 256], sizes = [8, 256], strides = [1, 1]} : vector<8x512xf32> to vector<8x256xf32>
    %41 = vector.shape_cast %40 : vector<8x256xf32> to vector<1x8x256xf32>
    %cst_18 = arith.constant dense<0.000000e+00> : vector<1xf32>
    %42 = vector.multi_reduction <add>, %41, %cst_18 [1, 2] : vector<1x8x256xf32> to vector<1xf32>
    %43 = vector.shape_cast %42 : vector<1xf32> to vector<1x1x1xf32>
    %44 = vector.extract %43[0, 0, 0] : f32 from vector<1x1x1xf32>
    %45 = arith.mulf %40, %40 : vector<8x256xf32>
    %46 = vector.shape_cast %45 : vector<8x256xf32> to vector<1x8x256xf32>
    %cst_19 = arith.constant dense<0.000000e+00> : vector<1xf32>
    %47 = vector.multi_reduction <add>, %46, %cst_19 [1, 2] : vector<1x8x256xf32> to vector<1xf32>
    %48 = vector.shape_cast %47 : vector<1xf32> to vector<1x1x1xf32>
    %49 = vector.extract %48[0, 0, 0] : f32 from vector<1x1x1xf32>
    %cst_20 = arith.constant 1.728000e+03 : f32
    %50 = arith.divf %44, %cst_20 : f32
    %51 = arith.mulf %44, %44 : f32
    %cst_21 = arith.constant 1.728000e+03 : f32
    %52 = arith.divf %51, %cst_21 : f32
    %53 = arith.subf %49, %52 : f32
    %cst_22 = arith.constant 1.728000e+03 : f32
    %cst_23 = arith.constant 1.000000e+00 : f32
    %54 = arith.subf %cst_22, %cst_23 : f32
    %55 = arith.divf %53, %54 : f32
    %56 = math.sqrt %55 : f32
    %cst_24 = arith.constant 9.99999974E-6 : f32
    %57 = arith.addf %56, %cst_24 : f32
    %58 = vector.broadcast %57 : f32 to vector<8x1xf32>
    %59 = arith.divf %2, %58 : vector<8x1xf32>
    %60 = vector.broadcast %50 : f32 to vector<8x1xf32>
    %61 = arith.mulf %60, %59 : vector<8x1xf32>
    %62 = arith.subf %3, %61 : vector<8x1xf32>
    %63 = vector.broadcast %59 : vector<8x1xf32> to vector<8x256xf32>
    %64 = arith.mulf %40, %63 : vector<8x256xf32>
    %65 = vector.broadcast %62 : vector<8x1xf32> to vector<8x256xf32>
    %66 = arith.addf %64, %65 : vector<8x256xf32>
    %cst_25 = arith.constant 0.000000e+00 : f32
    %67 = vector.broadcast %cst_25 : f32 to vector<8x256xf32>
    %68 = arith.cmpf oge, %66, %67 : vector<8x256xf32>
    %cst_26 = arith.constant 0.00999999977 : f32
    %69 = vector.broadcast %cst_26 : f32 to vector<8x256xf32>
    %70 = arith.mulf %69, %66 : vector<8x256xf32>
    %71 = arith.select %68, %66, %70 : vector<8x256xi1>, vector<8x256xf32>
    %c1_27 = arith.constant 1 : index
    %c0_28 = arith.constant 0 : index
    %c0_29 = arith.constant 0 : index
    %72 = vector.load %arg4[%c1_27, %c0_28, %c0_29] : memref<2x8x256xf32, #tpu.memory_space<vmem>>, vector<1x8x256xf32>
    %73 = vector.shape_cast %72 : vector<1x8x256xf32> to vector<8x256xf32>
    %74 = vector.shape_cast %71 : vector<8x256xf32> to vector<1x8x256xf32>
    tpu.vector_store %arg4[%c1_27, %c0_28, %c0_29], %74 {strides = array<i32>} : memref<2x8x256xf32, #tpu.memory_space<vmem>>, vector<1x8x256xf32>,
    return
  }
  func.func @transform_0(%arg0: i32) -> (i32, i32) {
    %c0_i32 = arith.constant 0 : i32
    %c0_i32_0 = arith.constant 0 : i32
    %c0_i32_1 = arith.constant 0 : i32
    return %c0_i32, %c0_i32_0 : i32, i32
  }
  func.func @transform_1(%arg0: i32) -> (i32, i32) {
    %c0_i32 = arith.constant 0 : i32
    %c0_i32_0 = arith.constant 0 : i32
    %c0_i32_1 = arith.constant 0 : i32
    return %c0_i32, %c0_i32_0 : i32, i32
  }
  func.func @transform_2(%arg0: i32) -> (i32, i32) {
    %c0_i32 = arith.constant 0 : i32
    %c0_i32_0 = arith.constant 0 : i32
    %c0_i32_1 = arith.constant 0 : i32
    return %c0_i32, %c0_i32_0 : i32, i32
  }
  func.func @transform_3(%arg0: i32) -> (i32, i32, i32) {
    %c0_i32 = arith.constant 0 : i32
    %c0_i32_0 = arith.constant 0 : i32
    %c0_i32_1 = arith.constant 0 : i32
    %c0_i32_2 = arith.constant 0 : i32
    return %c0_i32, %c0_i32_0, %c0_i32_1 : i32, i32, i32
  }
}

</mosaic_0001>

<llo_original>
// kernel: tpu_custom_call.1
$region0: #{tpu_custom_call.1}
  #allocation0 [shape = 'u32[]', space=smem, size = 0x4, offset = 0x4, fixed_abs, tag = 'smem constant byte address 0x4 - core index']
  #allocation1 [shape = 'u32[72,128]{1,0:T(1,128)}', space=vmem, size = 0x9000, scoped, tag = 'internal scratch']
  %s0 = inlined_call_operand.hbm [shape: bf16[109,512], index: 0, kind: input, shape index: {}]
  %s1 = inlined_call_operand.vmem [shape: bf16[8,109], index: 1, kind: input, shape index: {}]
  %s2 = inlined_call_operand.vmem [shape: f32[8,2], index: 2, kind: input, shape index: {}]
  %s3 = inlined_call_operand.hbm [shape: f32[2,8,256], index: 3, kind: output, shape index: {}]
  %s4 = sld [smem:[#allocation0]]
  $region26: #{tpu_custom_call.1} parent=0
    _
  %s6 = ssub.s32 1, %s4
  %s7 = scalar_select 0, %s6, %s4
  $region1: #{tpu_custom_call.1} parent=0
    #allocation2 [shape = 'u8[114688]{0}', space=vmem, size = 0x1c000, scoped, tag = 'input window, operand 0, single buffered']
    #allocation3 [shape = 's32[1]{0}', space=sflag, size = 0x4, scoped, tag = 'scoped memory for tpu_custom_call.1']
    #allocation4 [shape = 's32[1]{0}', space=sflag, size = 0x4, scoped, tag = 'scoped memory for tpu_custom_call.1']
    #allocation5 [shape = 'u8[16384]{0}', space=vmem, size = 0x4000, scoped, tag = 'output window, operand 0, single buffered']
    %8 = vsyncpa [#allocation3], 0
    %9 = vsyncpa [#allocation4], 0
    // Predicated region
    $region2: #{tpu_custom_call.1} parent=1 // pred_check
      _
    $region3: #{tpu_custom_call.1} parent=1 // pred_check_branch
      %11 = sbr.rel (0) target = $region5
    $region4: #{tpu_custom_call.1} parent=1 // pred_region
      %13 = vsyncadd [#allocation3], 0
      %s14 = sshll.u32 %s0, 4
      %s15 = int_to_ptr.hbm [resolvable:$true] %s14
      %s16 = sshll.u32 [#allocation2], 4
      %s17 = int_to_ptr.vmem [resolvable:$true] %s16
      %22 = dma.hbm_to_vmem [thread:$0]  %s15, 3584, %s17, [#allocation3], 256, 256, 16
    $region5: #{tpu_custom_call.1} parent=1 // pred_fallthru
      _
    // Predicated region
    $region6: #{tpu_custom_call.1} parent=1 // pred_check
      _
    $region7: #{tpu_custom_call.1} parent=1 // pred_check_branch
      %24 = sbr.rel (0) target = $region9
    $region8: #{tpu_custom_call.1} parent=1 // pred_region
      _
    $region9: #{tpu_custom_call.1} parent=1 // pred_fallthru
      _
    // Predicated region
    $region10: #{tpu_custom_call.1} parent=1 // pred_check
      _
    $region11: #{tpu_custom_call.1} parent=1 // pred_check_branch
      %26 = sbr.rel (0) target = $region13
    $region12: #{tpu_custom_call.1} parent=1 // pred_region
      _
    $region13: #{tpu_custom_call.1} parent=1 // pred_fallthru
      _
    // Predicated region
    $region14: #{tpu_custom_call.1} parent=1 // pred_check
      _
    $region15: #{tpu_custom_call.1} parent=1 // pred_check_branch
      %28 = sbr.rel (0) target = $region17
    $region16: #{tpu_custom_call.1} parent=1 // pred_region
      %30 = dma.done [#allocation3], 3584
    $region17: #{tpu_custom_call.1} parent=1 // pred_fallthru
      _
    %v32 = vld [vmem:[#allocation2] sm:$0xff]
    %v33 = vld [vmem:[#allocation2 + $0x8] sm:$0xff]
    %v34 = vld [vmem:[#allocation2 + $0x10] sm:$0xff]
    %v35 = vld [vmem:[#allocation2 + $0x18] sm:$0xff]
    %v36 = vld [vmem:[#allocation2 + $0x20] sm:$0xff]
    %v37 = vld [vmem:[#allocation2 + $0x28] sm:$0xff]
    %v38 = vld [vmem:[#allocation2 + $0x30] sm:$0xff]
    %v39 = vld [vmem:[#allocation2 + $0x38] sm:$0xff]
    %v40 = vld [vmem:[#allocation2 + $0x40] sm:$0xff]
    %v41 = vld [vmem:[#allocation2 + $0x48] sm:$0xff]
    %v42 = vld [vmem:[#allocation2 + $0x50] sm:$0xff]
    %v43 = vld [vmem:[#allocation2 + $0x58] sm:$0xff]
    %v44 = vld [vmem:[#allocation2 + $0x60] sm:$0xff]
    %v45 = vld [vmem:[#allocation2 + $0x68] sm:$0xff]
    %v46 = vld [vmem:[#allocation2 + $0x70] sm:$0xff]
    %v47 = vld [vmem:[#allocation2 + $0x78] sm:$0xff]
    %v48 = vld [vmem:[#allocation2 + $0x80] sm:$0xff]
    %v49 = vld [vmem:[#allocation2 + $0x88] sm:$0xff]
    %v50 = vld [vmem:[#allocation2 + $0x90] sm:$0xff]
    %v51 = vld [vmem:[#allocation2 + $0x98] sm:$0xff]
    %v52 = vld [vmem:[#allocation2 + $0xa0] sm:$0xff]
    %v53 = vld [vmem:[#allocation2 + $0xa8] sm:$0xff]
    %v54 = vld [vmem:[#allocation2 + $0xb0] sm:$0xff]
    %v55 = vld [vmem:[#allocation2 + $0xb8] sm:$0xff]
    %v56 = vld [vmem:[#allocation2 + $0xc0] sm:$0xff]
    %v57 = vld [vmem:[#allocation2 + $0xc8] sm:$0xff]
    %v58 = vld [vmem:[#allocation2 + $0xd0] sm:$0x77]
    %v59 = vld [vmem:[#allocation2 + $0xd8] sm:$0x77]
    %v60 = vld [vmem:[%s1] sm:$0xf]
    %v61 = vld [vmem:[%s2] sm:$0xff]
    %v90 = vunpack.c.l.b16 %v32
    %v91 = vunpack.c.h.b16 %v32
    %v92 = vunpack.c.l.b16 %v33
    %v93 = vunpack.c.h.b16 %v33
    %v94 = vunpack.c.l.b16 %v34
    %v95 = vunpack.c.h.b16 %v34
    %v96 = vunpack.c.l.b16 %v35
    %v97 = vunpack.c.h.b16 %v35
    %v98 = vunpack.c.l.b16 %v36
    %v99 = vunpack.c.h.b16 %v36
    %v100 = vunpack.c.l.b16 %v37
    %v101 = vunpack.c.h.b16 %v37
    %v102 = vunpack.c.l.b16 %v38
    %v103 = vunpack.c.h.b16 %v38
    %v104 = vunpack.c.l.b16 %v39
    %v105 = vunpack.c.h.b16 %v39
    %v106 = vunpack.c.l.b16 %v40
    %v107 = vunpack.c.h.b16 %v40
    %v108 = vunpack.c.l.b16 %v41
    %v109 = vunpack.c.h.b16 %v41
    %v110 = vunpack.c.l.b16 %v42
    %v111 = vunpack.c.h.b16 %v42
    %v112 = vunpack.c.l.b16 %v43
    %v113 = vunpack.c.h.b16 %v43
    %v114 = vunpack.c.l.b16 %v44
    %v115 = vunpack.c.h.b16 %v44
    %v116 = vunpack.c.l.b16 %v45
    %v117 = vunpack.c.h.b16 %v45
    %v118 = vunpack.c.l.b16 %v46
    %v119 = vunpack.c.h.b16 %v46
    %v120 = vunpack.c.l.b16 %v47
    %v121 = vunpack.c.h.b16 %v47
    %v122 = vunpack.c.l.b16 %v48
    %v123 = vunpack.c.h.b16 %v48
    %v124 = vunpack.c.l.b16 %v49
    %v125 = vunpack.c.h.b16 %v49
    %v126 = vunpack.c.l.b16 %v50
    %v127 = vunpack.c.h.b16 %v50
    %v128 = vunpack.c.l.b16 %v51
    %v129 = vunpack.c.h.b16 %v51
    %v130 = vunpack.c.l.b16 %v52
    %v131 = vunpack.c.h.b16 %v52
    %v132 = vunpack.c.l.b16 %v53
    %v133 = vunpack.c.h.b16 %v53
    %v134 = vunpack.c.l.b16 %v54
    %v135 = vunpack.c.h.b16 %v54
    %v136 = vunpack.c.l.b16 %v55
    %v137 = vunpack.c.h.b16 %v55
    %v138 = vunpack.c.l.b16 %v56
    %v139 = vunpack.c.h.b16 %v56
    %v140 = vunpack.c.l.b16 %v57
    %v141 = vunpack.c.h.b16 %v57
    %v142 = vunpack.c.l.b16 %v58
    %v143 = vunpack.c.h.b16 %v58
    %v144 = vunpack.c.l.b16 %v59
    %v145 = vunpack.c.h.b16 %v59
    %v146 = vpack.c.b16 %v94, %v90
    %v147 = vpack.c.b16 %v95, %v91
    %v148 = vpack.c.b16 %v96, %v92
    %v149 = vpack.c.b16 %v97, %v93
    %v150 = vpack.c.b16 %v102, %v98
    %v151 = vpack.c.b16 %v103, %v99
    %v152 = vpack.c.b16 %v104, %v100
    %v153 = vpack.c.b16 %v105, %v101
    %v154 = vpack.c.b16 %v110, %v106
    %v155 = vpack.c.b16 %v111, %v107
    %v156 = vpack.c.b16 %v112, %v108
    %v157 = vpack.c.b16 %v113, %v109
    %v158 = vpack.c.b16 %v118, %v114
    %v159 = vpack.c.b16 %v119, %v115
    %v160 = vpack.c.b16 %v120, %v116
    %v161 = vpack.c.b16 %v121, %v117
    %v162 = vpack.c.b16 %v126, %v122
    %v163 = vpack.c.b16 %v127, %v123
    %v164 = vpack.c.b16 %v128, %v124
    %v165 = vpack.c.b16 %v129, %v125
    %v166 = vpack.c.b16 %v134, %v130
    %v167 = vpack.c.b16 %v135, %v131
    %v168 = vpack.c.b16 %v136, %v132
    %v169 = vpack.c.b16 %v137, %v133
    %v170 = vpack.c.b16 %v142, %v138
    %v171 = vpack.c.b16 %v143, %v139
    %v172 = vpack.c.b16 %v144, %v140
    %v173 = vpack.c.b16 %v145, %v141
    %vm198 = vcmask 891904
    %v200 = vsel %vm198, %v60, 0
    %vm202 = vcmask 1045504
    %vm203 = vcmask 1046528
    %v204 = vsel %vm202, 4294967295, 65535
    %v205 = vsel %vm203, %v204, 0
    %v207 = vand.u32 %v170, %v205
    %v210 = vand.u32 %v171, %v205
    %v213 = vand.u32 %v172, %v205
    %v216 = vand.u32 %v173, %v205
    %218 = vmatpush.bf16.msra.mxu0 0
    %219 = vmatpush.bf16.msra.mxu0 %v207
    %220 = vmatpush.bf16.msra.mxu0 %v166
    %221 = vmatpush.bf16.msra.mxu0 %v162
    %222 = vmatpush.bf16.msra.mxu0 %v158
    %223 = vmatpush.bf16.msra.mxu0 %v154
    %224 = vmatpush.bf16.msra.mxu0 %v150
    %225 = vmatpush.bf16.msra.mxu0 %v146
    %226 = vmatmul.bf16.gmra.mxu0 %v200
    %v227 = vpop.f32.mrf.mxu0
    %v228 = vadd.f32 0.0, %v227
    %v229 = vpop.f32.mrf.mxu0
    %230 = vdwg.mxu0
    %231 = vmatpush.bf16.msra.mxu0 0
    %232 = vmatpush.bf16.msra.mxu0 %v210
    %233 = vmatpush.bf16.msra.mxu0 %v167
    %234 = vmatpush.bf16.msra.mxu0 %v163
    %235 = vmatpush.bf16.msra.mxu0 %v159
    %236 = vmatpush.bf16.msra.mxu0 %v155
    %237 = vmatpush.bf16.msra.mxu0 %v151
    %238 = vmatpush.bf16.msra.mxu0 %v147
    %239 = vmatmul.bf16.gmra.mxu0 %v200
    %v240 = vpop.f32.mrf.mxu0
    %v241 = vadd.f32 0.0, %v240
    %v242 = vpop.f32.mrf.mxu0
    %243 = vdwg.mxu0
    %244 = vmatpush.bf16.msra.mxu0 0
    %245 = vmatpush.bf16.msra.mxu0 %v213
    %246 = vmatpush.bf16.msra.mxu0 %v168
    %247 = vmatpush.bf16.msra.mxu0 %v164
    %248 = vmatpush.bf16.msra.mxu0 %v160
    %249 = vmatpush.bf16.msra.mxu0 %v156
    %250 = vmatpush.bf16.msra.mxu0 %v152
    %251 = vmatpush.bf16.msra.mxu0 %v148
    %252 = vmatmul.bf16.gmra.mxu0 %v200
    %v253 = vpop.f32.mrf.mxu0
    %v254 = vadd.f32 0.0, %v253
    %v255 = vpop.f32.mrf.mxu0
    %256 = vdwg.mxu0
    %257 = vmatpush.bf16.msra.mxu0 0
    %258 = vmatpush.bf16.msra.mxu0 %v216
    %259 = vmatpush.bf16.msra.mxu0 %v169
    %260 = vmatpush.bf16.msra.mxu0 %v165
    %261 = vmatpush.bf16.msra.mxu0 %v161
    %262 = vmatpush.bf16.msra.mxu0 %v157
    %263 = vmatpush.bf16.msra.mxu0 %v153
    %264 = vmatpush.bf16.msra.mxu0 %v149
    %265 = vmatmul.bf16.gmra.mxu0 %v200
    %v266 = vpop.f32.mrf.mxu0
    %v267 = vadd.f32 0.0, %v266
    %v268 = vpop.f32.mrf.mxu0
    %269 = vdwg.mxu0
    %v270 = vadd.f32 %v228, %v241
    %271 = vadd.xlane.f32.xlu0 %v270
    %v272 = vpop.xlane.xlu0 %271
    %v273 = vrot.slane %v272, 4
    %v274 = vadd.f32 %v272, %v273
    %v275 = vrot.slane %v274, 2
    %v276 = vadd.f32 %v274, %v275
    %v277 = vrot.slane %v276, 1
    %v278 = vadd.f32 %v276, %v277
    %s279 = vtos %v278
    %v280 = vmul.f32 %v228, %v228
    %v281 = vmul.f32 %v241, %v241
    %v282 = vadd.f32 %v280, %v281
    %283 = vadd.xlane.f32.xlu0 %v282
    %v284 = vpop.xlane.xlu0 %283
    %v285 = vrot.slane %v284, 4
    %v286 = vadd.f32 %v284, %v285
    %v287 = vrot.slane %v286, 2
    %v288 = vadd.f32 %v286, %v287
    %v289 = vrot.slane %v288, 1
    %v290 = vadd.f32 %v288, %v289
    %s291 = vtos %v290
    %v292 = vrcp.pop 1728.0
    %v293 = vmul.f32 1728.0, %v292
    %v294 = vsub.f32 1.0, %v293
    %v295 = vmul.f32 %v292, %v294
    %v296 = vadd.f32 %v292, %v295
    %vm297 = vweird.f32 %v292
    %v298 = vsel %vm297, %v292, %v296
    %s299 = vtos %v298
    %s300 = smul.f32 %s279, %s299
    %s301 = smul.f32 %s279, %s279
    %v302 = vrcp.pop 1728.0
    %v303 = vmul.f32 1728.0, %v302
    %v304 = vsub.f32 1.0, %v303
    %v305 = vmul.f32 %v302, %v304
    %v306 = vadd.f32 %v302, %v305
    %vm307 = vweird.f32 %v302
    %v308 = vsel %vm307, %v302, %v306
    %s309 = vtos %v308
    %s310 = smul.f32 %s301, %s309
    %s311 = ssub.f32 %s291, %s310
    %v312 = vrcp.pop 1727.0
    %v313 = vmul.f32 1727.0, %v312
    %v314 = vsub.f32 1.0, %v313
    %v315 = vmul.f32 %v312, %v314
    %v316 = vadd.f32 %v312, %v315
    %vm317 = vweird.f32 %v312
    %v318 = vsel %vm317, %v312, %v316
    %s319 = vtos %v318
    %s320 = smul.f32 %s311, %s319
    %v321 = vstv %s320
    %v322 = vrsqrt.pop %v321
    %v323 = vmul.f32 %v322, %v321
    %v324 = vmul.f32 %v323, %v322
    %v325 = vmul.f32 0.5, %v324
    %v326 = vsub.f32 1.5, %v325
    %v327 = vmul.f32 %v322, %v326
    %v328 = vmul.f32 %v321, %v327
    %vm329 = vcmp.eq.f32.partialorder %v321, inf
    %v330 = vsel %vm329, %v321, %v328
    %vm331 = vcmp.eq.f32.partialorder %v321, 0.0
    %v332 = vand.u32 %v321, 2147483648
    %v333 = vsel %vm331, %v332, %v330
    %s334 = vtos %v333
    %s335 = sadd.f32 %s334, 1e-05
    %v336 = vstv %s335
    %v337 = vrcp.pop %v336
    %v338 = vmul.f32 %v336, %v337
    %v339 = vsub.f32 1.0, %v338
    %v340 = vmul.f32 %v337, %v339
    %v341 = vadd.f32 %v337, %v340
    %vm342 = vweird.f32 %v336
    %vm343 = vweird.f32 %v337
    %vm344 = vmor %vm342, %vm343
    %v345 = vsel %vm344, %v337, %v341
    %v346 = vand.u32 2147483647, %v336
    %vm347 = vcmp.eq.f32.partialorder %v346, 8.507059e+37
    %v348 = vand.u32 %v336, 2147483648
    %v349 = vor.u32 1.1754944e-38, %v348
    %v350 = vsel %vm347, %v349, %v345
    %v351 = vmul.f32 %v61, %v350
    %v352 = vstv %s300
    %v353 = vmul.f32 %v352, %v351
    %355 = vrot.lane.b32.xlu0 %v353, 1
    %v356 = vpop.permute.xlu0 %355
    %v358 = vsub.f32 %v61, %v356
    %360 = vset.pattern.permute.xlu0 0
    %361 = vperm.xlu0 %360, %v351
    %v362 = vpop.permute.xlu0 %361
    %v364 = vmul.f32 %v228, %v362
    %v365 = vmul.f32 %v241, %v362
    %367 = vset.pattern.permute.xlu0 1
    %368 = vperm.xlu0 %367, %v358
    %v369 = vpop.permute.xlu0 %368
    %v371 = vadd.f32 %v364, %v369
    %v372 = vadd.f32 %v365, %v369
    %vm373 = vcmp.ge.f32.partialorder %v371, 0.0
    %vm374 = vcmp.ge.f32.partialorder %v372, 0.0
    %v375 = vmul.f32 %v371, 0.01
    %v376 = vmul.f32 %v372, 0.01
    %v377 = vsel %vm373, %v371, %v375
    %v378 = vsel %vm374, %v372, %v376
    %379 = vst [vmem:[#allocation5] sm:$0xff] %v377
    %380 = vst [vmem:[#allocation5 + $0x8] sm:$0xff] %v378
    %v381 = vadd.f32 %v254, %v267
    %382 = vadd.xlane.f32.xlu0 %v381
    %v383 = vpop.xlane.xlu0 %382
    %v384 = vrot.slane %v383, 4
    %v385 = vadd.f32 %v383, %v384
    %v386 = vrot.slane %v385, 2
    %v387 = vadd.f32 %v385, %v386
    %v388 = vrot.slane %v387, 1
    %v389 = vadd.f32 %v387, %v388
    %s390 = vtos %v389
    %v391 = vmul.f32 %v254, %v254
    %v392 = vmul.f32 %v267, %v267
    %v393 = vadd.f32 %v391, %v392
    %394 = vadd.xlane.f32.xlu0 %v393
    %v395 = vpop.xlane.xlu0 %394
    %v396 = vrot.slane %v395, 4
    %v397 = vadd.f32 %v395, %v396
    %v398 = vrot.slane %v397, 2
    %v399 = vadd.f32 %v397, %v398
    %v400 = vrot.slane %v399, 1
    %v401 = vadd.f32 %v399, %v400
    %s402 = vtos %v401
    %v403 = vrcp.pop 1728.0
    %v404 = vmul.f32 1728.0, %v403
    %v405 = vsub.f32 1.0, %v404
    %v406 = vmul.f32 %v403, %v405
    %v407 = vadd.f32 %v403, %v406
    %vm408 = vweird.f32 %v403
    %v409 = vsel %vm408, %v403, %v407
    %s410 = vtos %v409
    %s411 = smul.f32 %s390, %s410
    %s412 = smul.f32 %s390, %s390
    %v413 = vrcp.pop 1728.0
    %v414 = vmul.f32 1728.0, %v413
    %v415 = vsub.f32 1.0, %v414
    %v416 = vmul.f32 %v413, %v415
    %v417 = vadd.f32 %v413, %v416
    %vm418 = vweird.f32 %v413
    %v419 = vsel %vm418, %v413, %v417
    %s420 = vtos %v419
    %s421 = smul.f32 %s412, %s420
    %s422 = ssub.f32 %s402, %s421
    %v423 = vrcp.pop 1727.0
    %v424 = vmul.f32 1727.0, %v423
    %v425 = vsub.f32 1.0, %v424
    %v426 = vmul.f32 %v423, %v425
    %v427 = vadd.f32 %v423, %v426
    %vm428 = vweird.f32 %v423
    %v429 = vsel %vm428, %v423, %v427
    %s430 = vtos %v429
    %s431 = smul.f32 %s422, %s430
    %v432 = vstv %s431
    %v433 = vrsqrt.pop %v432
    %v434 = vmul.f32 %v433, %v432
    %v435 = vmul.f32 %v434, %v433
    %v436 = vmul.f32 0.5, %v435
    %v437 = vsub.f32 1.5, %v436
    %v438 = vmul.f32 %v433, %v437
    %v439 = vmul.f32 %v432, %v438
    %vm440 = vcmp.eq.f32.partialorder %v432, inf
    %v441 = vsel %vm440, %v432, %v439
    %vm442 = vcmp.eq.f32.partialorder %v432, 0.0
    %v443 = vand.u32 %v432, 2147483648
    %v444 = vsel %vm442, %v443, %v441
    %s445 = vtos %v444
    %s446 = sadd.f32 %s445, 1e-05
    %v447 = vstv %s446
    %v448 = vrcp.pop %v447
    %v449 = vmul.f32 %v447, %v448
    %v450 = vsub.f32 1.0, %v449
    %v451 = vmul.f32 %v448, %v450
    %v452 = vadd.f32 %v448, %v451
    %vm453 = vweird.f32 %v447
    %vm454 = vweird.f32 %v448
    %vm455 = vmor %vm453, %vm454
    %v456 = vsel %vm455, %v448, %v452
    %v457 = vand.u32 2147483647, %v447
    %vm458 = vcmp.eq.f32.partialorder %v457, 8.507059e+37
    %v459 = vand.u32 %v447, 2147483648
    %v460 = vor.u32 1.1754944e-38, %v459
    %v461 = vsel %vm458, %v460, %v456
    %v462 = vmul.f32 %v61, %v461
    %v463 = vstv %s411
    %v464 = vmul.f32 %v463, %v462
    %466 = vrot.lane.b32.xlu0 %v464, 1
    %v467 = vpop.permute.xlu0 %466
    %v469 = vsub.f32 %v61, %v467
    %471 = vset.pattern.permute.xlu0 0
    %472 = vperm.xlu0 %471, %v462
    %v473 = vpop.permute.xlu0 %472
    %v475 = vmul.f32 %v254, %v473
    %v476 = vmul.f32 %v267, %v473
    %478 = vset.pattern.permute.xlu0 1
    %479 = vperm.xlu0 %478, %v469
    %v480 = vpop.permute.xlu0 %479
    %v482 = vadd.f32 %v475, %v480
    %v483 = vadd.f32 %v476, %v480
    %vm484 = vcmp.ge.f32.partialorder %v482, 0.0
    %vm485 = vcmp.ge.f32.partialorder %v483, 0.0
    %v486 = vmul.f32 %v482, 0.01
    %v487 = vmul.f32 %v483, 0.01
    %v488 = vsel %vm484, %v482, %v486
    %v489 = vsel %vm485, %v483, %v487
    %s490 = scalar_lea.vmem [#allocation5], 16
    %491 = vst [vmem:[%s490] sm:$0xff] %v488
    %492 = vst [vmem:[%s490 + $0x8] sm:$0xff] %v489
    // Predicated region
    $region18: #{tpu_custom_call.1} parent=1 // pred_check
      _
    $region19: #{tpu_custom_call.1} parent=1 // pred_check_branch
      %494 = sbr.rel (0) target = $region21
    $region20: #{tpu_custom_call.1} parent=1 // pred_region
      %496 = vsyncadd [#allocation4], 0
      %s497 = sshll.u32 [#allocation5], 4
      %s498 = int_to_ptr.vmem [resolvable:$true] %s497
      %s499 = sshll.u32 %s3, 4
      %s500 = int_to_ptr.hbm [resolvable:$true] %s499
      %505 = dma.vmem_to_hbm [thread:$0]  %s498, 512, %s500, [#allocation4], 256, 256, 16
    $region21: #{tpu_custom_call.1} parent=1 // pred_fallthru
      _
    // Predicated region
    $region22: #{tpu_custom_call.1} parent=1 // pred_check
      _
    $region23: #{tpu_custom_call.1} parent=1 // pred_check_branch
      %507 = sbr.rel (0) target = $region25
    $region24: #{tpu_custom_call.1} parent=1 // pred_region
      %509 = dma.done [#allocation4], 512
    $region25: #{tpu_custom_call.1} parent=1 // pred_fallthru
      _
    %510 = vsyncpa [#allocation3], 1
    %511 = vsyncpa [#allocation4], 1

</llo_original>
